<compile_context>
chip_gen: v7x
topology: tpu7x:2x2x1
jax: 0.10.0
libtpu: 0.0.40
codegen_flags: <defaults>
</compile_context>

<pallas_src>
import functools
import math

import jax
import jax.numpy as jnp
from jax import lax
from jax.experimental import pallas as pl
from jax.experimental.pallas import tpu as pltpu


def _ram_loss_kernel(predict_ref, label_ref, logpi_ref, baseline_ref, out_ref,
                     *, gamma, T):
    # predict_ref, label_ref : (1, B) f32   (batch lane-dense)
    # logpi_ref              : (T, B) f32   (per-step logpi already summed over its
    #                                        trailing feature dim, stacked over steps)
    # baseline_ref           : (1, 1) f32 in SMEM (scalar)
    # out_ref                : (1, 4) f32 -> [a_loss, l_loss, b_loss, R.sum()]
    predict = predict_ref[...]
    label = label_ref[...]
    baseline = baseline_ref[0, 0]

    # reward: 1*(sigmoid(predict) > 0.5) compared against label.
    # sigmoid(x) > 0.5  <=>  x > 0, so skip the transcendental.
    pred = jnp.where(predict > 0.0, 1.0, 0.0)
    R = jnp.where(label == pred, 1.0, 0.0)                       # (1, B)

    # a_loss = BCEWithLogitsLoss(reduction='sum')(predict, label)
    bce = (jnp.maximum(predict, 0.0) - predict * label
           + jnp.log(1.0 + jnp.exp(-jnp.abs(predict))))
    a_loss = jnp.sum(bce, axis=1, keepdims=True)                 # (1, 1)

    # REINFORCE: l_loss = -sum_t gamma^(T-1-t) * sum_b logpi[t,b] * (R[b]-baseline)
    Rb = R - baseline                                            # (1, B)
    t_idx = lax.broadcasted_iota(jnp.int32, (T, 1), 0).astype(jnp.float32)
    # gamma^(T-1-t) = exp(log(gamma) * (T-1-t)); log(gamma) is a compile-time const.
    disc = jnp.exp(math.log(gamma) * (float(T - 1) - t_idx))     # (T, 1)
    contrib = logpi_ref[...] * disc * Rb                         # (T, B)
    per_t = jnp.sum(contrib, axis=1, keepdims=True)              # (T, 1) lane reduce
    l_loss = -jnp.sum(per_t, axis=0, keepdims=True)              # (1, 1) sublane reduce

    # b_loss = sum_b (baseline - R[b])^2
    bd = baseline - R
    b_loss = jnp.sum(bd * bd, axis=1, keepdims=True)             # (1, 1)

    r_sum = jnp.sum(R, axis=1, keepdims=True)                    # (1, 1)

    # Fuse the four scalars into a single lane-dense (1, 4) store.
    lane = lax.broadcasted_iota(jnp.int32, (1, 4), 1)
    out_ref[...] = (jnp.where(lane == 0, a_loss, 0.0)
                    + jnp.where(lane == 1, l_loss, 0.0)
                    + jnp.where(lane == 2, b_loss, 0.0)
                    + jnp.where(lane == 3, r_sum, 0.0))


def ram_loss_terminal(predict, label, logpi_list, baseline, gamma):
    """predict, label: (B, 1); logpi_list: list of T arrays (B, D); baseline: (1, 1).

    Returns (a_loss, l_loss, b_loss, R.sum()) as f32 scalars.
    """
    B = predict.shape[0]
    T = len(logpi_list)

    # Lane-dense batch layout.
    predict_row = predict.reshape(1, B).astype(jnp.float32)
    label_row = label.reshape(1, B).astype(jnp.float32)
    # Per-step logpi.sum(-1) (a squeeze for D == 1), stacked over steps -> (T, B).
    logpi_mat = jnp.stack(
        [lp.reshape(B, -1).sum(axis=-1) for lp in logpi_list], axis=0
    ).astype(jnp.float32)
    baseline2d = baseline.reshape(1, 1).astype(jnp.float32)

    kernel = functools.partial(_ram_loss_kernel, gamma=float(gamma), T=T)
    out = pl.pallas_call(
        kernel,
        out_shape=jax.ShapeDtypeStruct((1, 4), jnp.float32),
        in_specs=[
            pl.BlockSpec(memory_space=pltpu.MemorySpace.VMEM),   # predict (1, B)
            pl.BlockSpec(memory_space=pltpu.MemorySpace.VMEM),   # label   (1, B)
            pl.BlockSpec(memory_space=pltpu.MemorySpace.VMEM),   # logpi   (T, B)
            pl.BlockSpec(memory_space=pltpu.MemorySpace.SMEM),   # baseline scalar
        ],
        out_specs=pl.BlockSpec(memory_space=pltpu.MemorySpace.VMEM),
    )(predict_row, label_row, logpi_mat, baseline2d)

    return out[0, 0], out[0, 1], out[0, 2], out[0, 3]


class LOSS:
    """Host-side mirror of the PyTorch module (forward pass only)."""

    def __init__(self, T, gamma):
        # TODO(synk): baseline is a learnable nn.Parameter in PyTorch; only the
        # forward value is used here (no gradients / optimizer step).
        self.baseline = 0.1 * jnp.ones((1, 1), jnp.float32)
        self.T = T
        self.gamma = gamma

    def initialize(self, B):
        self.t = 0
        self.logpi = []

    def forward(self, predict, label, logpi):
        self.t += 1
        self.logpi.append(logpi)
        if self.t == self.T:
            return ram_loss_terminal(predict, label, self.logpi,
                                     self.baseline, self.gamma)
        return (None, None, None, None)


if __name__ == "__main__":
    key = jax.random.PRNGKey(0)
    kp, kl, klp = jax.random.split(key, 3)

    B, T, gamma = 8, 6, 0.9
    predict = 2.0 * jax.random.normal(kp, (B, 1), jnp.float32)
    label = jax.random.bernoulli(kl, 0.5, (B, 1)).astype(jnp.float32)
    logpi_list = [jax.random.normal(k, (B, 1), jnp.float32) - 1.0
                  for k in jax.random.split(klp, T)]

    loss_mod = LOSS(T=T, gamma=gamma)
    loss_mod.initialize(B)
    outs = (None, None, None, None)
    for t in range(T):
        outs = loss_mod.forward(predict, label, logpi_list[t])
    a_loss, l_loss, b_loss, r_sum = jax.block_until_ready(outs)

    # Pure-JAX reference mirroring the PyTorch module.
    baseline = loss_mod.baseline
    pred_ref = (predict > 0.0).astype(jnp.float32)      # == (sigmoid(predict) > 0.5)
    R = (label == pred_ref).squeeze().astype(jnp.float32)           # (B,)
    a_ref = jnp.sum(jnp.maximum(predict, 0.0) - predict * label
                    + jnp.log1p(jnp.exp(-jnp.abs(predict))))
    l_ref = 0.0
    R_b = R - baseline[0, 0]
    for lp in reversed(logpi_list):
        l_ref = l_ref + (-(lp.sum(-1) * R_b).sum())
        R_b = gamma * R_b
    b_ref = jnp.sum((baseline[0, 0] - R) ** 2)
    r_ref = R.sum()

    assert jnp.allclose(a_loss, a_ref, atol=1e-4, rtol=1e-4)
    assert jnp.allclose(l_loss, l_ref, atol=1e-4, rtol=1e-4)
    assert jnp.allclose(b_loss, b_ref, atol=1e-4, rtol=1e-4)
    assert jnp.allclose(r_sum, r_ref, atol=1e-6, rtol=1e-6)

    print("KERNEL_OK")
</pallas_src>

<mosaic_0001>
module attributes {stable_mosaic.version = 11 : i64} {
  func.func @_ram_loss_kernel(%arg0: memref<1x8xf32, #tpu.memory_space<vmem>>, %arg1: memref<1x8xf32, #tpu.memory_space<vmem>>, %arg2: memref<6x8xf32, #tpu.memory_space<vmem>>, %arg3: memref<1x1xf32, #tpu.memory_space<smem>>, %arg4: memref<1x4xf32, #tpu.memory_space<vmem>>) attributes {dimension_semantics = [], scalar_prefetch = 0 : i64, scratch_operands = 0 : i64, tpu.core_type = #tpu.core_type<tc>} {
    %c0 = arith.constant 0 : index
    %c0_0 = arith.constant 0 : index
    %0 = vector.load %arg0[%c0, %c0_0] : memref<1x8xf32, #tpu.memory_space<vmem>>, vector<1x8xf32>
    %c0_1 = arith.constant 0 : index
    %c0_2 = arith.constant 0 : index
    %1 = vector.load %arg1[%c0_1, %c0_2] : memref<1x8xf32, #tpu.memory_space<vmem>>, vector<1x8xf32>
    %c0_3 = arith.constant 0 : index
    %c0_4 = arith.constant 0 : index
    %2 = memref.load %arg3[%c0_3, %c0_4] : memref<1x1xf32, #tpu.memory_space<smem>>
    %cst = arith.constant 0.000000e+00 : f32
    %3 = vector.broadcast %cst : f32 to vector<1x8xf32>
    %4 = arith.cmpf ogt, %0, %3 : vector<1x8xf32>
    %cst_5 = arith.constant 1.000000e+00 : f32
    %cst_6 = arith.constant 0.000000e+00 : f32
    %5 = vector.broadcast %cst_5 : f32 to vector<1x8xf32>
    %6 = vector.broadcast %cst_6 : f32 to vector<1x8xf32>
    %7 = arith.select %4, %5, %6 : vector<1x8xi1>, vector<1x8xf32>
    %8 = arith.cmpf oeq, %1, %7 : vector<1x8xf32>
    %cst_7 = arith.constant 1.000000e+00 : f32
    %cst_8 = arith.constant 0.000000e+00 : f32
    %9 = vector.broadcast %cst_7 : f32 to vector<1x8xf32>
    %10 = vector.broadcast %cst_8 : f32 to vector<1x8xf32>
    %11 = arith.select %8, %9, %10 : vector<1x8xi1>, vector<1x8xf32>
    %cst_9 = arith.constant 0.000000e+00 : f32
    %12 = vector.broadcast %cst_9 : f32 to vector<1x8xf32>
    %13 = arith.maximumf %0, %12 : vector<1x8xf32>
    %14 = arith.mulf %0, %1 : vector<1x8xf32>
    %15 = arith.subf %13, %14 : vector<1x8xf32>
    %16 = math.absf %0 : vector<1x8xf32>
    %cst_10 = arith.constant 0.000000e+00 : f32
    %17 = vector.broadcast %cst_10 : f32 to vector<1x8xf32>
    %18 = arith.subf %17, %16 : vector<1x8xf32>
    %19 = math.exp %18 : vector<1x8xf32>
    %cst_11 = arith.constant 1.000000e+00 : f32
    %20 = vector.broadcast %cst_11 : f32 to vector<1x8xf32>
    %21 = arith.addf %20, %19 : vector<1x8xf32>
    %22 = math.log %21 : vector<1x8xf32>
    %23 = arith.addf %15, %22 : vector<1x8xf32>
    %cst_12 = arith.constant dense<0.000000e+00> : vector<1xf32>
    %24 = vector.multi_reduction <add>, %23, %cst_12 [1] : vector<1x8xf32> to vector<1xf32>
    %25 = vector.shape_cast %24 : vector<1xf32> to vector<1x1xf32>
    %26 = vector.broadcast %2 : f32 to vector<1x8xf32>
    %27 = arith.subf %11, %26 : vector<1x8xf32>
    %28 = tpu.iota {dimensions = array<i32: 0>} : vector<6x1xi32>
    %29 = arith.sitofp %28 : vector<6x1xi32> to vector<6x1xf32>
    %cst_13 = arith.constant 5.000000e+00 : f32
    %30 = vector.broadcast %cst_13 : f32 to vector<6x1xf32>
    %31 = arith.subf %30, %29 : vector<6x1xf32>
    %cst_14 = arith.constant -0.105360515 : f32
    %32 = vector.broadcast %cst_14 : f32 to vector<6x1xf32>
    %33 = arith.mulf %32, %31 : vector<6x1xf32>
    %34 = math.exp %33 : vector<6x1xf32>
    %c0_15 = arith.constant 0 : index
    %c0_16 = arith.constant 0 : index
    %35 = vector.load %arg2[%c0_15, %c0_16] : memref<6x8xf32, #tpu.memory_space<vmem>>, vector<6x8xf32>
    %36 = vector.broadcast %34 : vector<6x1xf32> to vector<6x8xf32>
    %37 = arith.mulf %35, %36 : vector<6x8xf32>
    %38 = vector.broadcast %27 : vector<1x8xf32> to vector<6x8xf32>
    %39 = arith.mulf %37, %38 : vector<6x8xf32>
    %cst_17 = arith.constant dense<0.000000e+00> : vector<6xf32>
    %40 = vector.multi_reduction <add>, %39, %cst_17 [1] : vector<6x8xf32> to vector<6xf32>
    %41 = vector.shape_cast %40 : vector<6xf32> to vector<6x1xf32>
    %cst_18 = arith.constant dense<0.000000e+00> : vector<1xf32>
    %42 = vector.multi_reduction <add>, %41, %cst_18 [0] : vector<6x1xf32> to vector<1xf32>
    %43 = vector.shape_cast %42 : vector<1xf32> to vector<1x1xf32>
    %cst_19 = arith.constant 0.000000e+00 : f32
    %44 = vector.broadcast %cst_19 : f32 to vector<1x1xf32>
    %45 = arith.subf %44, %43 : vector<1x1xf32>
    %46 = vector.broadcast %2 : f32 to vector<1x8xf32>
    %47 = arith.subf %46, %11 : vector<1x8xf32>
    %48 = arith.mulf %47, %47 : vector<1x8xf32>
    %cst_20 = arith.constant dense<0.000000e+00> : vector<1xf32>
    %49 = vector.multi_reduction <add>, %48, %cst_20 [1] : vector<1x8xf32> to vector<1xf32>
    %50 = vector.shape_cast %49 : vector<1xf32> to vector<1x1xf32>
    %cst_21 = arith.constant dense<0.000000e+00> : vector<1xf32>
    %51 = vector.multi_reduction <add>, %11, %cst_21 [1] : vector<1x8xf32> to vector<1xf32>
    %52 = vector.shape_cast %51 : vector<1xf32> to vector<1x1xf32>
    %53 = tpu.iota {dimensions = array<i32: 1>} : vector<1x4xi32>
    %c0_i32 = arith.constant 0 : i32
    %54 = vector.broadcast %c0_i32 : i32 to vector<1x4xi32>
    %55 = arith.cmpi eq, %53, %54 : vector<1x4xi32>
    %cst_22 = arith.constant 0.000000e+00 : f32
    %56 = vector.shape_cast %25 : vector<1x1xf32> to vector<1x1xf32>
    %57 = vector.broadcast %56 : vector<1x1xf32> to vector<1x4xf32>
    %58 = vector.broadcast %cst_22 : f32 to vector<1x4xf32>
    %59 = arith.select %55, %57, %58 : vector<1x4xi1>, vector<1x4xf32>
    %c1_i32 = arith.constant 1 : i32
    %60 = vector.broadcast %c1_i32 : i32 to vector<1x4xi32>
    %61 = arith.cmpi eq, %53, %60 : vector<1x4xi32>
    %cst_23 = arith.constant 0.000000e+00 : f32
    %62 = vector.shape_cast %45 : vector<1x1xf32> to vector<1x1xf32>
    %63 = vector.broadcast %62 : vector<1x1xf32> to vector<1x4xf32>
    %64 = vector.broadcast %cst_23 : f32 to vector<1x4xf32>
    %65 = arith.select %61, %63, %64 : vector<1x4xi1>, vector<1x4xf32>
    %66 = arith.addf %59, %65 : vector<1x4xf32>
    %c2_i32 = arith.constant 2 : i32
    %67 = vector.broadcast %c2_i32 : i32 to vector<1x4xi32>
    %68 = arith.cmpi eq, %53, %67 : vector<1x4xi32>
    %cst_24 = arith.constant 0.000000e+00 : f32
    %69 = vector.shape_cast %50 : vector<1x1xf32> to vector<1x1xf32>
    %70 = vector.broadcast %69 : vector<1x1xf32> to vector<1x4xf32>
    %71 = vector.broadcast %cst_24 : f32 to vector<1x4xf32>
    %72 = arith.select %68, %70, %71 : vector<1x4xi1>, vector<1x4xf32>
    %73 = arith.addf %66, %72 : vector<1x4xf32>
    %c3_i32 = arith.constant 3 : i32
    %74 = vector.broadcast %c3_i32 : i32 to vector<1x4xi32>
    %75 = arith.cmpi eq, %53, %74 : vector<1x4xi32>
    %cst_25 = arith.constant 0.000000e+00 : f32
    %76 = vector.shape_cast %52 : vector<1x1xf32> to vector<1x1xf32>
    %77 = vector.broadcast %76 : vector<1x1xf32> to vector<1x4xf32>
    %78 = vector.broadcast %cst_25 : f32 to vector<1x4xf32>
    %79 = arith.select %75, %77, %78 : vector<1x4xi1>, vector<1x4xf32>
    %80 = arith.addf %73, %79 : vector<1x4xf32>
    %c0_26 = arith.constant 0 : index
    %c0_27 = arith.constant 0 : index
    %81 = vector.load %arg4[%c0_26, %c0_27] : memref<1x4xf32, #tpu.memory_space<vmem>>, vector<1x4xf32>
    tpu.vector_store %arg4[%c0_26, %c0_27], %80 {strides = array<i32>} : memref<1x4xf32, #tpu.memory_space<vmem>>, vector<1x4xf32>,
    return
  }
}

</mosaic_0001>

<llo_original>
// kernel: tpu_custom_call.1
$region0: #{tpu_custom_call.1}
  #allocation0 [shape = 'u32[]', space=smem, size = 0x4, offset = 0x4, fixed_abs, tag = 'smem constant byte address 0x4 - core index']
  #allocation1 [shape = 'u32[144,128]{1,0:T(1,128)}', space=vmem, size = 0x12000, scoped, tag = 'internal scratch']
  #allocation2 [shape = 'f32[1,1]{1,0:T(1,128)S(6)}', space=smem, size = 0x200, scoped, tag = 'scoped memory for tpu_custom_call.1']
  %s0 = inlined_call_operand.vmem [shape: f32[1,8], index: 0, kind: input, shape index: {}]
  %s1 = inlined_call_operand.vmem [shape: f32[1,8], index: 1, kind: input, shape index: {}]
  %s2 = inlined_call_operand.vmem [shape: f32[6,8], index: 2, kind: input, shape index: {}]
  %s3 = inlined_call_operand.<no memory space> [shape: f32[1,1], index: 3, kind: input, shape index: {}]
  %s4 = inlined_call_operand.hbm [shape: f32[1,4], index: 4, kind: output, shape index: {}]
  %s5 = sld [smem:[#allocation0]]
  $region26: #{tpu_custom_call.1} parent=0
    _
  %s7 = ssub.s32 1, %s5
  %s8 = scalar_select 0, %s7, %s5
  %9 = sst [smem:[#allocation2]] %s3
  $region1: #{tpu_custom_call.1} parent=0
    #allocation3 [shape = 'u8[512]{0}', space=vmem, size = 0x400, scoped, tag = 'output window, operand 0, single buffered']
    #allocation4 [shape = 's32[1]{0}', space=sflag, size = 0x4, scoped, tag = 'scoped memory for tpu_custom_call.1']
    %10 = vsyncpa [#allocation4], 0
    // Predicated region
    $region2: #{tpu_custom_call.1} parent=1 // pred_check
      _
    $region3: #{tpu_custom_call.1} parent=1 // pred_check_branch
      %12 = sbr.rel (0) target = $region5
    $region4: #{tpu_custom_call.1} parent=1 // pred_region
      _
    $region5: #{tpu_custom_call.1} parent=1 // pred_fallthru
      _
    // Predicated region
    $region6: #{tpu_custom_call.1} parent=1 // pred_check
      _
    $region7: #{tpu_custom_call.1} parent=1 // pred_check_branch
      %14 = sbr.rel (0) target = $region9
    $region8: #{tpu_custom_call.1} parent=1 // pred_region
      _
    $region9: #{tpu_custom_call.1} parent=1 // pred_fallthru
      _
    // Predicated region
    $region10: #{tpu_custom_call.1} parent=1 // pred_check
      _
    $region11: #{tpu_custom_call.1} parent=1 // pred_check_branch
      %16 = sbr.rel (0) target = $region13
    $region12: #{tpu_custom_call.1} parent=1 // pred_region
      _
    $region13: #{tpu_custom_call.1} parent=1 // pred_fallthru
      _
    // Predicated region
    $region14: #{tpu_custom_call.1} parent=1 // pred_check
      _
    $region15: #{tpu_custom_call.1} parent=1 // pred_check_branch
      %18 = sbr.rel (0) target = $region17
    $region16: #{tpu_custom_call.1} parent=1 // pred_region
      _
    $region17: #{tpu_custom_call.1} parent=1 // pred_fallthru
      _
    %v19 = vld [vmem:[%s0] sm:$0x1]
    %v20 = vld [vmem:[%s1] sm:$0x1]
    %s21 = sld [smem:[#allocation2]]
    %vm22 = vcmp.gt.f32.partialorder %v19, 0.0
    %v23 = vsel %vm22, 1.0, 0.0
    %vm24 = vcmp.eq.f32.partialorder %v20, %v23
    %v25 = vsel %vm24, 1.0, 0.0
    %v26 = vmax.f32 %v19, 0.0
    %v27 = vmul.f32 %v19, %v20
    %v28 = vsub.f32 %v26, %v27
    %v29 = vand.u32 2147483647, %v19
    %v30 = vsub.f32 0.0, %v29
    %v31 = vmul.f32 %v30, 1.442695
    %v32 = vpow.pop %v31
    %v33 = vadd.f32 %v32, 1.0
    %v34 = vlog2.pop %v33
    %v35 = vmul.f32 %v34, 0.6931472
    %v36 = vadd.f32 %v28, %v35
    %vm37 = vcmask 57344
    %v38 = vsel %vm37, %v36, 0.0
    %39 = vadd.xlane.f32.xlu0 %v38
    %v40 = vpop.xlane.xlu0 %39
    %v41 = vstv %s21
    %v42 = vsub.f32 %v25, %v41
    %v43 = vlaneseq
    %v44 = vshrl.u32 %v43, 7
    %v45 = vcvt.s32.f32 %v44
    %v46 = vsub.f32 5.0, %v45
    %v47 = vmul.f32 %v46, -0.105360515
    %v48 = vmul.f32 %v47, 1.442695
    %v49 = vpow.pop %v48
    %v50 = vld [vmem:[%s2] sm:$0x3f]
    %v51 = vmul.f32 %v50, %v49
    %v53 = vlaneseq
    %v54 = vshrl.u32 %v53, 7
    %v55 = vsub.s32 0, %v54
    %v56 = vrot.slane %v42, %v55
    %v58 = vmul.f32 %v51, %v56
    %vm59 = vcmask 62464
    %v60 = vsel %vm59, %v58, 0.0
    %61 = vadd.xlane.f32.xlu0 %v60
    %v62 = vpop.xlane.xlu0 %61
    %vm63 = vcmask 1045504
    %v64 = vsel %vm63, %v62, 0.0
    %v65 = vrot.slane %v64, 4
    %v66 = vadd.f32 %v64, %v65
    %v67 = vrot.slane %v66, 2
    %v68 = vadd.f32 %v66, %v67
    %v69 = vrot.slane %v68, 1
    %v70 = vadd.f32 %v68, %v69
    %v71 = vsub.f32 0.0, %v70
    %v72 = vsub.f32 %v41, %v25
    %v73 = vmul.f32 %v72, %v72
    %v74 = vsel %vm37, %v73, 0.0
    %75 = vadd.xlane.f32.xlu0 %v74
    %v76 = vpop.xlane.xlu0 %75
    %v77 = vsel %vm37, %v25, 0.0
    %78 = vadd.xlane.f32.xlu0 %v77
    %v79 = vpop.xlane.xlu0 %78
    %v80 = vlaneseq
    %v81 = vand.u32 %v80, 127
    %vm82 = vcmp.eq.s32.totalorder %v81, 0
    %v83 = vsel %vm82, %v40, 0.0
    %vm84 = vcmp.eq.s32.totalorder %v81, 1
    %v85 = vsel %vm84, %v71, 0.0
    %v86 = vadd.f32 %v83, %v85
    %vm87 = vcmp.eq.s32.totalorder %v81, 2
    %v88 = vsel %vm87, %v76, 0.0
    %v89 = vadd.f32 %v86, %v88
    %vm90 = vcmp.eq.s32.totalorder %v81, 3
    %v91 = vsel %vm90, %v79, 0.0
    %v92 = vadd.f32 %v89, %v91
    %vm93 = vcmask 24576
    %94 = vst.msk [vmem:[#allocation3] sm:$0x1] %vm93, %v92
    // Predicated region
    $region18: #{tpu_custom_call.1} parent=1 // pred_check
      _
    $region19: #{tpu_custom_call.1} parent=1 // pred_check_branch
      %96 = sbr.rel (0) target = $region21
    $region20: #{tpu_custom_call.1} parent=1 // pred_region
      %s98 = ssub.s32 16, 16
      %99 = vsyncadd [#allocation4], %s98
      %s101 = sshll.u32 [#allocation3], 4
      %s102 = int_to_ptr.vmem [resolvable:$true] %s101
      %104 = dma.vmem_to_hbm [thread:$0]  %s102, 16, %s4, [#allocation4]
    $region21: #{tpu_custom_call.1} parent=1 // pred_fallthru
      _
    // Predicated region
    $region22: #{tpu_custom_call.1} parent=1 // pred_check
      _
    $region23: #{tpu_custom_call.1} parent=1 // pred_check_branch
      %106 = sbr.rel (0) target = $region25
    $region24: #{tpu_custom_call.1} parent=1 // pred_region
      %107 = dma.done [#allocation4], 16
    $region25: #{tpu_custom_call.1} parent=1 // pred_fallthru
      _
    %108 = vsyncpa [#allocation4], 1

</llo_original>
